<compile_context>
chip_gen: v7x
topology: tpu7x:2x2x1
jax: 0.10.0
libtpu: 0.0.40
codegen_flags: <defaults>
</compile_context>

<pallas_src>
import functools

import jax
import jax.numpy as jnp
from jax.experimental import pallas as pl
from jax.experimental.pallas import tpu as pltpu

LANE = 128          # TPU lane width; output layer padded to this for unmasked stores.
SUBLANE = 8         # sublane granularity for batch-tile shapes.


def mlp_kernel(x_ref, w1t_ref, b1_ref, w2t_ref, b2_ref, o_ref):
    # x_ref:   (TB, 784)  batch tile (f32 or bf16; cast below is a no-op for bf16)
    # w1t_ref: (784, 256) hidden weight, pre-transposed, bf16, VMEM-resident
    # b1_ref:  (1, 256)   f32
    # w2t_ref: (256, 128) output weight, pre-transposed + zero-padded 10->128, bf16
    # b2_ref:  (1, 128)   f32, zero-padded
    # o_ref:   (TB, 128)  lane-dense f32 output tile
    x = x_ref[...].astype(jnp.bfloat16)
    h = jnp.dot(x, w1t_ref[...], preferred_element_type=jnp.float32) + b1_ref[...]
    h = jnp.maximum(h, 0.0)                                   # ReLU, stays in VMEM
    y = jnp.dot(h.astype(jnp.bfloat16), w2t_ref[...],
                preferred_element_type=jnp.float32) + b2_ref[...]
    o_ref[...] = y.astype(o_ref.dtype)


def prepare_params(w1, b1, w2, b2, lane_pad=LANE):
    """One-time parameter massaging (outside the per-call path):
    transpose both weights, cast them to bf16 (MXU-native), keep biases f32,
    and zero-pad the 10-wide output layer to 128 lanes."""
    out_f = w2.shape[0]
    pad = (-out_f) % lane_pad
    w1t = jnp.asarray(w1).T.astype(jnp.bfloat16)                              # (784, 256)
    b1r = jnp.asarray(b1).reshape(1, -1).astype(jnp.float32)                  # (1, 256)
    w2t = jnp.pad(jnp.asarray(w2).T, ((0, 0), (0, pad))).astype(jnp.bfloat16) # (256, 128)
    b2r = jnp.pad(jnp.asarray(b2).reshape(1, -1),
                  ((0, 0), (0, pad))).astype(jnp.float32)                     # (1, 128)
    return w1t, b1r, w2t, b2r, out_f


def _mlp_block_call(x, w1t, b1, w2t_pad, b2_pad, tb):
    """Single pallas_call over `rows` batch rows; requires rows % tb == 0."""
    rows, in_f = x.shape
    hid = w1t.shape[1]
    out_pad = w2t_pad.shape[1]
    n_blocks = rows // tb

    flops = 2 * rows * (in_f * hid + hid * out_pad)
    bytes_accessed = (rows * in_f * x.dtype.itemsize
                      + in_f * hid * 2 + hid * out_pad * 2     # bf16 weights
                      + (hid + out_pad) * 4                    # f32 biases
                      + rows * out_pad * 4)                    # f32 output

    resident = dict(pipeline_mode=pl.Buffered(1))   # constant index_map -> 1 buffer

    return pl.pallas_call(
        mlp_kernel,
        out_shape=jax.ShapeDtypeStruct((rows, out_pad), jnp.float32),
        grid_spec=pltpu.PrefetchScalarGridSpec(
            num_scalar_prefetch=0,
            grid=(n_blocks,),
            in_specs=[
                pl.BlockSpec((tb, in_f), lambda i: (i, 0)),                  # x: batch-tiled
                pl.BlockSpec((in_f, hid), lambda i: (0, 0), **resident),     # W1^T resident
                pl.BlockSpec((1, hid), lambda i: (0, 0), **resident),        # b1 resident
                pl.BlockSpec((hid, out_pad), lambda i: (0, 0), **resident),  # W2^T resident
                pl.BlockSpec((1, out_pad), lambda i: (0, 0), **resident),    # b2 resident
            ],
            out_specs=pl.BlockSpec((tb, out_pad), lambda i: (i, 0)),
        ),
        compiler_params=pltpu.CompilerParams(
            dimension_semantics=("parallel",),      # independent batch tiles (v7x: 2 TCs)
            vmem_limit_bytes=48 << 20,              # lets v5e reach TILE_B=2048 too
        ),
        cost_estimate=pl.CostEstimate(
            flops=flops, transcendentals=0, bytes_accessed=bytes_accessed),
    )(x, w1t, b1, w2t_pad, b2_pad)


@functools.partial(jax.jit, static_argnames=("out_features", "tile_b"))
def mlp_forward(x, w1t, b1, w2t_pad, b2_pad, *, out_features, tile_b=2048):
    """x: (B, 784), f32 or bf16 (bf16 preferred: halves the dominant HBM read).
    Params as produced by prepare_params.  Returns (B, out_features) f32."""
    B, _ = x.shape

    tb = min(tile_b, B)
    if tb != B:
        tb = max(SUBLANE, (tb // SUBLANE) * SUBLANE)

    main_rows = (B // tb) * tb
    outs = []
    if main_rows > 0:
        outs.append(_mlp_block_call(x[:main_rows], w1t, b1, w2t_pad, b2_pad, tb))

    rem = B - main_rows
    if rem > 0:
        # Pad only the small ragged tail to a sublane multiple (never the full x).
        rem_pad = ((rem + SUBLANE - 1) // SUBLANE) * SUBLANE
        x_tail = x[main_rows:]
        if rem_pad != rem:
            x_tail = jnp.pad(x_tail, ((0, rem_pad - rem), (0, 0)))
        y_tail = _mlp_block_call(x_tail, w1t, b1, w2t_pad, b2_pad, rem_pad)[:rem]
        outs.append(y_tail)

    y_pad = outs[0] if len(outs) == 1 else jnp.concatenate(outs, axis=0)
    # Drop the zero-padded output lanes (never leak downstream).
    return y_pad[:, :out_features]


if __name__ == "__main__":
    key = jax.random.PRNGKey(0)
    k_x, k_w1, k_b1, k_w2, k_b2 = jax.random.split(key, 5)

    B, IN_F, HID, OUT_F = 32, 784, 256, 10

    # Deterministic parameter init (shapes per nn.Linear(784,256) / nn.Linear(256,10)).
    bound1 = 1.0 / jnp.sqrt(IN_F)
    w1 = jax.random.uniform(k_w1, (HID, IN_F), jnp.float32, -bound1, bound1)
    b1 = jax.random.uniform(k_b1, (HID,), jnp.float32, -bound1, bound1)
    bound2 = 1.0 / jnp.sqrt(HID)
    w2 = jax.random.uniform(k_w2, (OUT_F, HID), jnp.float32, -bound2, bound2)
    b2 = jax.random.uniform(k_b2, (OUT_F,), jnp.float32, -bound2, bound2)

    x = jax.random.normal(k_x, (B, IN_F), jnp.float32)

    # One-time param prep (transpose + bf16 cast + lane padding), outside the per-call path.
    w1t, b1r, w2t_pad, b2_pad, out_f = prepare_params(w1, b1, w2, b2)

    # Supply x in bf16 (what the data pipeline would do) to halve the HBM read.
    x_bf = x.astype(jnp.bfloat16)

    y = mlp_forward(x_bf, w1t, b1r, w2t_pad, b2_pad, out_features=out_f)
    jax.block_until_ready(y)

    # Reference mirroring the kernel's numerics: bf16-rounded operands,
    # f32 accumulation (HIGHEST-precision dots on the widened values).
    xr = x_bf.astype(jnp.float32)
    w1r = w1.astype(jnp.bfloat16).astype(jnp.float32)
    w2r = w2.astype(jnp.bfloat16).astype(jnp.float32)
    h_ref = jnp.maximum(
        jnp.dot(xr, w1r.T, precision=jax.lax.Precision.HIGHEST) + b1, 0.0)
    h_ref = h_ref.astype(jnp.bfloat16).astype(jnp.float32)
    y_ref = jnp.dot(h_ref, w2r.T, precision=jax.lax.Precision.HIGHEST) + b2

    assert y.shape == (B, OUT_F)
    assert y.dtype == jnp.float32
    max_err = float(jnp.max(jnp.abs(y - y_ref)))
    assert jnp.allclose(y, y_ref, atol=1e-2, rtol=1e-2), max_err

    print("KERNEL_OK")
</pallas_src>

<mosaic_0001>
module attributes {stable_mosaic.version = 11 : i64} {
  func.func @mlp_kernel(%arg0: i32, %arg1: memref<32x784xbf16, #tpu.memory_space<vmem>>, %arg2: memref<784x256xbf16, #tpu.memory_space<vmem>>, %arg3: memref<1x256xf32, #tpu.memory_space<vmem>>, %arg4: memref<256x128xbf16, #tpu.memory_space<vmem>>, %arg5: memref<1x128xf32, #tpu.memory_space<vmem>>, %arg6: memref<32x128xf32, #tpu.memory_space<vmem>>) attributes {dimension_semantics = [#tpu.dimension_semantics<parallel>], iteration_bounds = array<i64: 1>, scalar_prefetch = 0 : i64, scratch_operands = 0 : i64, tpu.core_type = #tpu.core_type<tc>, window_params = [{transform_indices = @transform_0, window_bounds = array<i64: 32, 784>}, {pipeline_mode = #tpu.pipeline_mode<synchronous>, transform_indices = @transform_1, window_bounds = array<i64: 784, 256>}, {pipeline_mode = #tpu.pipeline_mode<synchronous>, transform_indices = @transform_2, window_bounds = array<i64: 1, 256>}, {pipeline_mode = #tpu.pipeline_mode<synchronous>, transform_indices = @transform_3, window_bounds = array<i64: 256, 128>}, {pipeline_mode = #tpu.pipeline_mode<synchronous>, transform_indices = @transform_4, window_bounds = array<i64: 1, 128>}, {transform_indices = @transform_5, window_bounds = array<i64: 32, 128>}]} {
    %c0 = arith.constant 0 : index
    %c0_0 = arith.constant 0 : index
    %0 = vector.load %arg1[%c0, %c0_0] : memref<32x784xbf16, #tpu.memory_space<vmem>>, vector<32x784xbf16>
    %c0_1 = arith.constant 0 : index
    %c0_2 = arith.constant 0 : index
    %1 = vector.load %arg2[%c0_1, %c0_2] : memref<784x256xbf16, #tpu.memory_space<vmem>>, vector<784x256xbf16>
    %cst = arith.constant dense<0.000000e+00> : vector<32x256xf32>
    %2 = tpu.matmul %0, %1, %cst {dimension_numbers = #tpu.dot_dimension_numbers<[1], [0], [0], [1], [0, 0, 1, 1], [], []>} : vector<32x784xbf16>, vector<784x256xbf16>, vector<32x256xf32> -> vector<32x256xf32>
    %c0_3 = arith.constant 0 : index
    %c0_4 = arith.constant 0 : index
    %3 = vector.load %arg3[%c0_3, %c0_4] : memref<1x256xf32, #tpu.memory_space<vmem>>, vector<1x256xf32>
    %4 = vector.broadcast %3 : vector<1x256xf32> to vector<32x256xf32>
    %5 = arith.addf %2, %4 : vector<32x256xf32>
    %cst_5 = arith.constant 0.000000e+00 : f32
    %6 = vector.broadcast %cst_5 : f32 to vector<32x256xf32>
    %7 = arith.maximumf %5, %6 : vector<32x256xf32>
    %8 = arith.truncf %7 : vector<32x256xf32> to vector<32x256xbf16>
    %c0_6 = arith.constant 0 : index
    %c0_7 = arith.constant 0 : index
    %9 = vector.load %arg4[%c0_6, %c0_7] : memref<256x128xbf16, #tpu.memory_space<vmem>>, vector<256x128xbf16>
    %cst_8 = arith.constant dense<0.000000e+00> : vector<32x128xf32>
    %10 = tpu.matmul %8, %9, %cst_8 {dimension_numbers = #tpu.dot_dimension_numbers<[1], [0], [0], [1], [0, 0, 1, 1], [], []>} : vector<32x256xbf16>, vector<256x128xbf16>, vector<32x128xf32> -> vector<32x128xf32>
    %c0_9 = arith.constant 0 : index
    %c0_10 = arith.constant 0 : index
    %11 = vector.load %arg5[%c0_9, %c0_10] : memref<1x128xf32, #tpu.memory_space<vmem>>, vector<1x128xf32>
    %12 = vector.broadcast %11 : vector<1x128xf32> to vector<32x128xf32>
    %13 = arith.addf %10, %12 : vector<32x128xf32>
    %c0_11 = arith.constant 0 : index
    %c0_12 = arith.constant 0 : index
    %14 = vector.load %arg6[%c0_11, %c0_12] : memref<32x128xf32, #tpu.memory_space<vmem>>, vector<32x128xf32>
    tpu.vector_store %arg6[%c0_11, %c0_12], %13 {strides = array<i32>} : memref<32x128xf32, #tpu.memory_space<vmem>>, vector<32x128xf32>,
    return
  }
  func.func @transform_0(%arg0: i32) -> (i32, i32) {
    %c0_i32 = arith.constant 0 : i32
    %c0_i32_0 = arith.constant 0 : i32
    return %arg0, %c0_i32 : i32, i32
  }
  func.func @transform_1(%arg0: i32) -> (i32, i32) {
    %c0_i32 = arith.constant 0 : i32
    %c0_i32_0 = arith.constant 0 : i32
    %c0_i32_1 = arith.constant 0 : i32
    return %c0_i32, %c0_i32_0 : i32, i32
  }
  func.func @transform_2(%arg0: i32) -> (i32, i32) {
    %c0_i32 = arith.constant 0 : i32
    %c0_i32_0 = arith.constant 0 : i32
    %c0_i32_1 = arith.constant 0 : i32
    return %c0_i32, %c0_i32_0 : i32, i32
  }
  func.func @transform_3(%arg0: i32) -> (i32, i32) {
    %c0_i32 = arith.constant 0 : i32
    %c0_i32_0 = arith.constant 0 : i32
    %c0_i32_1 = arith.constant 0 : i32
    return %c0_i32, %c0_i32_0 : i32, i32
  }
  func.func @transform_4(%arg0: i32) -> (i32, i32) {
    %c0_i32 = arith.constant 0 : i32
    %c0_i32_0 = arith.constant 0 : i32
    %c0_i32_1 = arith.constant 0 : i32
    return %c0_i32, %c0_i32_0 : i32, i32
  }
  func.func @transform_5(%arg0: i32) -> (i32, i32) {
    %c0_i32 = arith.constant 0 : i32
    %c0_i32_0 = arith.constant 0 : i32
    return %arg0, %c0_i32 : i32, i32
  }
}

</mosaic_0001>

<llo_original>
// kernel: mlp_forward.1
$region0: #{mlp_forward.1}
  #allocation0 [shape = 'u32[]', space=smem, size = 0x4, offset = 0x4, fixed_abs, tag = 'smem constant byte address 0x4 - core index']
  #allocation1 [shape = 'u32[144,128]{1,0:T(1,128)}', space=vmem, size = 0x12000, scoped, tag = 'internal scratch']
  %s0 = inlined_call_operand.hbm [shape: bf16[32,784], index: 0, kind: input, shape index: {}]
  %s1 = inlined_call_operand.hbm [shape: bf16[784,256], index: 1, kind: input, shape index: {}]
  %s2 = inlined_call_operand.vmem [shape: f32[1,256], index: 2, kind: input, shape index: {}]
  %s3 = inlined_call_operand.hbm [shape: bf16[256,128], index: 3, kind: input, shape index: {}]
  %s4 = inlined_call_operand.vmem [shape: f32[1,128], index: 4, kind: input, shape index: {}]
  %s5 = inlined_call_operand.vmem [shape: f32[32,128], index: 5, kind: output, shape index: {}]
  %s6 = sld [smem:[#allocation0]]
  $region42: #{mlp_forward.1} parent=0
    _
  %s8 = ssub.s32 1, %s6
  %s9 = scalar_select 0, %s8, %s6
  $region1: #{mlp_forward.1} parent=0
    #allocation2 [shape = 'u8[57344]{0}', space=vmem, size = 0xe000, scoped, tag = 'input window, operand 0, single buffered']
    #allocation3 [shape = 's32[1]{0}', space=sflag, size = 0x4, scoped, tag = 'scoped memory for mlp_forward.1']
    #allocation4 [shape = 'u8[401408]{0}', space=vmem, size = 0x62000, scoped, tag = 'input window, operand 1, single buffered']
    #allocation5 [shape = 's32[1]{0}', space=sflag, size = 0x4, scoped, tag = 'scoped memory for mlp_forward.1']
    #allocation6 [shape = 'u8[65536]{0}', space=vmem, size = 0x10000, scoped, tag = 'input window, operand 3, single buffered']
    %10 = vsyncpa [#allocation3], 0
    %11 = vsyncpa [#allocation5], 0
    // Predicated region
    $region2: #{mlp_forward.1} parent=1 // pred_check
      _
    $region3: #{mlp_forward.1} parent=1 // pred_check_branch
      %13 = sbr.rel (0) target = $region5
    $region4: #{mlp_forward.1} parent=1 // pred_region
      %s15 = ssub.s32 1792, 1792
      %16 = vsyncadd [#allocation3], %s15
      %s17 = sshll.u32 [#allocation2], 4
      %s18 = int_to_ptr.vmem [resolvable:$true] %s17
      %23 = dma.hbm_to_vmem [thread:$0]  %s0, 1792, %s18, [#allocation3], 448, 448, 28
    $region5: #{mlp_forward.1} parent=1 // pred_fallthru
      _
    // Predicated region
    $region6: #{mlp_forward.1} parent=1 // pred_check
      _
    $region7: #{mlp_forward.1} parent=1 // pred_check_branch
      %25 = sbr.rel (0) target = $region9
    $region8: #{mlp_forward.1} parent=1 // pred_region
      %s27 = ssub.s32 12544, 12544
      %28 = vsyncadd [#allocation5], %s27
      %s29 = sshll.u32 [#allocation4], 4
      %s30 = int_to_ptr.vmem [resolvable:$true] %s29
      %35 = dma.hbm_to_vmem [thread:$0]  %s1, 12544, %s30, [#allocation5], 128, 128, 8
    $region9: #{mlp_forward.1} parent=1 // pred_fallthru
      _
    // Predicated region
    $region10: #{mlp_forward.1} parent=1 // pred_check
      _
    $region11: #{mlp_forward.1} parent=1 // pred_check_branch
      %37 = sbr.rel (0) target = $region13
    $region12: #{mlp_forward.1} parent=1 // pred_region
      _
    $region13: #{mlp_forward.1} parent=1 // pred_fallthru
      _
    // Predicated region
    $region14: #{mlp_forward.1} parent=1 // pred_check
      _
    $region15: #{mlp_forward.1} parent=1 // pred_check_branch
      %39 = sbr.rel (0) target = $region17
    $region16: #{mlp_forward.1} parent=1 // pred_region
      %s41 = ssub.s32 2048, 2048
      %42 = vsyncadd [#allocation5], %s41
      %s43 = sshll.u32 [#allocation6], 4
      %s44 = int_to_ptr.vmem [resolvable:$true] %s43
      %49 = dma.hbm_to_vmem [thread:$0]  %s3, 2048, %s44, [#allocation5], 64, 64, 4
    $region17: #{mlp_forward.1} parent=1 // pred_fallthru
      _
    // Predicated region
    $region18: #{mlp_forward.1} parent=1 // pred_check
      _
    $region19: #{mlp_forward.1} parent=1 // pred_check_branch
      %51 = sbr.rel (0) target = $region21
    $region20: #{mlp_forward.1} parent=1 // pred_region
      _
    $region21: #{mlp_forward.1} parent=1 // pred_fallthru
      _
    // Predicated region
    $region22: #{mlp_forward.1} parent=1 // pred_check
      _
    $region23: #{mlp_forward.1} parent=1 // pred_check_branch
      %53 = sbr.rel (0) target = $region25
    $region24: #{mlp_forward.1} parent=1 // pred_region
      %54 = dma.done [#allocation3], 1792
    $region25: #{mlp_forward.1} parent=1 // pred_fallthru
      _
    // Predicated region
    $region26: #{mlp_forward.1} parent=1 // pred_check
      _
    $region27: #{mlp_forward.1} parent=1 // pred_check_branch
      %56 = sbr.rel (0) target = $region29
    $region28: #{mlp_forward.1} parent=1 // pred_region
      %57 = dma.done [#allocation5], 12544
    $region29: #{mlp_forward.1} parent=1 // pred_fallthru
      _
    // Predicated region
    $region30: #{mlp_forward.1} parent=1 // pred_check
      _
    $region31: #{mlp_forward.1} parent=1 // pred_check_branch
      %59 = sbr.rel (0) target = $region33
    $region32: #{mlp_forward.1} parent=1 // pred_region
      %60 = dma.done [#allocation5], 2048
    $region33: #{mlp_forward.1} parent=1 // pred_fallthru
      _
    %v62 = vld [vmem:[#allocation2] sm:$0xff]
    %v63 = vld [vmem:[#allocation2 + $0x8] sm:$0xff]
    %v64 = vld [vmem:[#allocation2 + $0x10] sm:$0xff]
    %v65 = vld [vmem:[#allocation2 + $0x18] sm:$0xf]
    %v66 = vld [vmem:[#allocation2 + $0x1c] sm:$0xff]
    %v67 = vld [vmem:[#allocation2 + $0x24] sm:$0xff]
    %v68 = vld [vmem:[#allocation2 + $0x2c] sm:$0xff]
    %v69 = vld [vmem:[#allocation2 + $0x34] sm:$0xf]
    %v70 = vld [vmem:[#allocation2 + $0x38] sm:$0xff]
    %v71 = vld [vmem:[#allocation2 + $0x40] sm:$0xff]
    %v72 = vld [vmem:[#allocation2 + $0x48] sm:$0xff]
    %v73 = vld [vmem:[#allocation2 + $0x50] sm:$0xf]
    %v74 = vld [vmem:[#allocation2 + $0x54] sm:$0xff]
    %v75 = vld [vmem:[#allocation2 + $0x5c] sm:$0xff]
    %v76 = vld [vmem:[#allocation2 + $0x64] sm:$0xff]
    %v77 = vld [vmem:[#allocation2 + $0x6c] sm:$0xf]
    %v78 = vld [vmem:[#allocation4] sm:$0xff]
    %v79 = vld [vmem:[#allocation4 + $0x8] sm:$0xff]
    %v80 = vld [vmem:[#allocation4 + $0x10] sm:$0xff]
    %v81 = vld [vmem:[#allocation4 + $0x18] sm:$0xff]
    %v82 = vld [vmem:[#allocation4 + $0x20] sm:$0xff]
    %v83 = vld [vmem:[#allocation4 + $0x28] sm:$0xff]
    %v84 = vld [vmem:[#allocation4 + $0x30] sm:$0xff]
    %v85 = vld [vmem:[#allocation4 + $0x38] sm:$0xff]
    %v86 = vld [vmem:[#allocation4 + $0x40] sm:$0xff]
    %v87 = vld [vmem:[#allocation4 + $0x48] sm:$0xff]
    %v88 = vld [vmem:[#allocation4 + $0x50] sm:$0xff]
    %v89 = vld [vmem:[#allocation4 + $0x58] sm:$0xff]
    %v90 = vld [vmem:[#allocation4 + $0x60] sm:$0xff]
    %v91 = vld [vmem:[#allocation4 + $0x68] sm:$0xff]
    %v92 = vld [vmem:[#allocation4 + $0x70] sm:$0xff]
    %v93 = vld [vmem:[#allocation4 + $0x78] sm:$0xff]
    %v94 = vld [vmem:[#allocation4 + $0x80] sm:$0xff]
    %v95 = vld [vmem:[#allocation4 + $0x88] sm:$0xff]
    %v96 = vld [vmem:[#allocation4 + $0x90] sm:$0xff]
    %v97 = vld [vmem:[#allocation4 + $0x98] sm:$0xff]
    %v98 = vld [vmem:[#allocation4 + $0xa0] sm:$0xff]
    %v99 = vld [vmem:[#allocation4 + $0xa8] sm:$0xff]
    %v100 = vld [vmem:[#allocation4 + $0xb0] sm:$0xff]
    %v101 = vld [vmem:[#allocation4 + $0xb8] sm:$0xff]
    %v102 = vld [vmem:[#allocation4 + $0xc0] sm:$0xff]
    %v103 = vld [vmem:[#allocation4 + $0xc8] sm:$0xff]
    %v104 = vld [vmem:[#allocation4 + $0xd0] sm:$0xff]
    %v105 = vld [vmem:[#allocation4 + $0xd8] sm:$0xff]
    %v106 = vld [vmem:[#allocation4 + $0xe0] sm:$0xff]
    %v107 = vld [vmem:[#allocation4 + $0xe8] sm:$0xff]
    %v108 = vld [vmem:[#allocation4 + $0xf0] sm:$0xff]
    %v109 = vld [vmem:[#allocation4 + $0xf8] sm:$0xff]
    %v110 = vld [vmem:[#allocation4 + $0x100] sm:$0xff]
    %v111 = vld [vmem:[#allocation4 + $0x108] sm:$0xff]
    %v112 = vld [vmem:[#allocation4 + $0x110] sm:$0xff]
    %v113 = vld [vmem:[#allocation4 + $0x118] sm:$0xff]
    %v114 = vld [vmem:[#allocation4 + $0x120] sm:$0xff]
    %v115 = vld [vmem:[#allocation4 + $0x128] sm:$0xff]
    %v116 = vld [vmem:[#allocation4 + $0x130] sm:$0xff]
    %v117 = vld [vmem:[#allocation4 + $0x138] sm:$0xff]
    %v118 = vld [vmem:[#allocation4 + $0x140] sm:$0xff]
    %v119 = vld [vmem:[#allocation4 + $0x148] sm:$0xff]
    %v120 = vld [vmem:[#allocation4 + $0x150] sm:$0xff]
    %v121 = vld [vmem:[#allocation4 + $0x158] sm:$0xff]
    %v122 = vld [vmem:[#allocation4 + $0x160] sm:$0xff]
    %v123 = vld [vmem:[#allocation4 + $0x168] sm:$0xff]
    %v124 = vld [vmem:[#allocation4 + $0x170] sm:$0xff]
    %v125 = vld [vmem:[#allocation4 + $0x178] sm:$0xff]
    %v126 = vld [vmem:[#allocation4 + $0x180] sm:$0xff]
    %v127 = vld [vmem:[#allocation4 + $0x188] sm:$0xff]
    %v128 = vld [vmem:[#allocation4 + $0x190] sm:$0xff]
    %v129 = vld [vmem:[#allocation4 + $0x198] sm:$0xff]
    %v130 = vld [vmem:[#allocation4 + $0x1a0] sm:$0xff]
    %v131 = vld [vmem:[#allocation4 + $0x1a8] sm:$0xff]
    %v132 = vld [vmem:[#allocation4 + $0x1b0] sm:$0xff]
    %v133 = vld [vmem:[#allocation4 + $0x1b8] sm:$0xff]
    %v134 = vld [vmem:[#allocation4 + $0x1c0] sm:$0xff]
    %v135 = vld [vmem:[#allocation4 + $0x1c8] sm:$0xff]
    %v136 = vld [vmem:[#allocation4 + $0x1d0] sm:$0xff]
    %v137 = vld [vmem:[#allocation4 + $0x1d8] sm:$0xff]
    %v138 = vld [vmem:[#allocation4 + $0x1e0] sm:$0xff]
    %v139 = vld [vmem:[#allocation4 + $0x1e8] sm:$0xff]
    %v140 = vld [vmem:[#allocation4 + $0x1f0] sm:$0xff]
    %v141 = vld [vmem:[#allocation4 + $0x1f8] sm:$0xff]
    %v142 = vld [vmem:[#allocation4 + $0x200] sm:$0xff]
    %v143 = vld [vmem:[#allocation4 + $0x208] sm:$0xff]
    %v144 = vld [vmem:[#allocation4 + $0x210] sm:$0xff]
    %v145 = vld [vmem:[#allocation4 + $0x218] sm:$0xff]
    %v146 = vld [vmem:[#allocation4 + $0x220] sm:$0xff]
    %v147 = vld [vmem:[#allocation4 + $0x228] sm:$0xff]
    %v148 = vld [vmem:[#allocation4 + $0x230] sm:$0xff]
    %v149 = vld [vmem:[#allocation4 + $0x238] sm:$0xff]
    %v150 = vld [vmem:[#allocation4 + $0x240] sm:$0xff]
    %v151 = vld [vmem:[#allocation4 + $0x248] sm:$0xff]
    %v152 = vld [vmem:[#allocation4 + $0x250] sm:$0xff]
    %v153 = vld [vmem:[#allocation4 + $0x258] sm:$0xff]
    %v154 = vld [vmem:[#allocation4 + $0x260] sm:$0xff]
    %v155 = vld [vmem:[#allocation4 + $0x268] sm:$0xff]
    %v156 = vld [vmem:[#allocation4 + $0x270] sm:$0xff]
    %v157 = vld [vmem:[#allocation4 + $0x278] sm:$0xff]
    %v158 = vld [vmem:[#allocation4 + $0x280] sm:$0xff]
    %v159 = vld [vmem:[#allocation4 + $0x288] sm:$0xff]
    %v160 = vld [vmem:[#allocation4 + $0x290] sm:$0xff]
    %v161 = vld [vmem:[#allocation4 + $0x298] sm:$0xff]
    %v162 = vld [vmem:[#allocation4 + $0x2a0] sm:$0xff]
    %v163 = vld [vmem:[#allocation4 + $0x2a8] sm:$0xff]
    %v164 = vld [vmem:[#allocation4 + $0x2b0] sm:$0xff]
    %v165 = vld [vmem:[#allocation4 + $0x2b8] sm:$0xff]
    %v166 = vld [vmem:[#allocation4 + $0x2c0] sm:$0xff]
    %v167 = vld [vmem:[#allocation4 + $0x2c8] sm:$0xff]
    %v168 = vld [vmem:[#allocation4 + $0x2d0] sm:$0xff]
    %v169 = vld [vmem:[#allocation4 + $0x2d8] sm:$0xff]
    %v170 = vld [vmem:[#allocation4 + $0x2e0] sm:$0xff]
    %v171 = vld [vmem:[#allocation4 + $0x2e8] sm:$0xff]
    %v172 = vld [vmem:[#allocation4 + $0x2f0] sm:$0xff]
    %v173 = vld [vmem:[#allocation4 + $0x2f8] sm:$0xff]
    %v174 = vld [vmem:[#allocation4 + $0x300] sm:$0xff]
    %v175 = vld [vmem:[#allocation4 + $0x308] sm:$0xff]
    %v176 = vld [vmem:[%s2] sm:$0x3]
    %v178 = vlaneseq
    %v179 = vshrl.u32 %v178, 7
    %v180 = vsub.s32 0, %v179
    %v181 = vrot.slane %v176, %v180
    %v182 = vlaneseq
    %v183 = vshrl.u32 %v182, 7
    %v184 = vsub.s32 1, %v183
    %v185 = vrot.slane %v176, %v184
    %v204 = vunpack.c.l.b16 %v62
    %v205 = vunpack.c.h.b16 %v62
    %v206 = vunpack.c.l.b16 %v63
    %v207 = vunpack.c.h.b16 %v63
    %v208 = vunpack.c.l.b16 %v64
    %v209 = vunpack.c.h.b16 %v64
    %v210 = vunpack.c.l.b16 %v65
    %v211 = vunpack.c.l.b16 %v66
    %v212 = vunpack.c.h.b16 %v66
    %v213 = vunpack.c.l.b16 %v67
    %v214 = vunpack.c.h.b16 %v67
    %v215 = vunpack.c.l.b16 %v68
    %v216 = vunpack.c.h.b16 %v68
    %v217 = vunpack.c.l.b16 %v69
    %v218 = vunpack.c.l.b16 %v70
    %v219 = vunpack.c.h.b16 %v70
    %v220 = vunpack.c.l.b16 %v71
    %v221 = vunpack.c.h.b16 %v71
    %v222 = vunpack.c.l.b16 %v72
    %v223 = vunpack.c.h.b16 %v72
    %v224 = vunpack.c.l.b16 %v73
    %v225 = vunpack.c.l.b16 %v74
    %v226 = vunpack.c.h.b16 %v74
    %v227 = vunpack.c.l.b16 %v75
    %v228 = vunpack.c.h.b16 %v75
    %v229 = vunpack.c.l.b16 %v76
    %v230 = vunpack.c.h.b16 %v76
    %v231 = vunpack.c.l.b16 %v77
    %v232 = vpack.c.b16 %v211, %v204
    %v233 = vpack.c.b16 %v212, %v205
    %v234 = vpack.c.b16 %v213, %v206
    %v235 = vpack.c.b16 %v214, %v207
    %v236 = vpack.c.b16 %v215, %v208
    %v237 = vpack.c.b16 %v216, %v209
    %v238 = vpack.c.b16 %v217, %v210
    %v239 = vpack.c.b16 %v225, %v218
    %v240 = vpack.c.b16 %v226, %v219
    %v241 = vpack.c.b16 %v227, %v220
    %v242 = vpack.c.b16 %v228, %v221
    %v243 = vpack.c.b16 %v229, %v222
    %v244 = vpack.c.b16 %v230, %v223
    %v245 = vpack.c.b16 %v231, %v224
    %v356 = vunpack.c.l.b16 %v78
    %v357 = vunpack.c.h.b16 %v78
    %v358 = vunpack.c.l.b16 %v79
    %v359 = vunpack.c.h.b16 %v79
    %v360 = vunpack.c.l.b16 %v80
    %v361 = vunpack.c.h.b16 %v80
    %v362 = vunpack.c.l.b16 %v81
    %v363 = vunpack.c.h.b16 %v81
    %v364 = vunpack.c.l.b16 %v82
    %v365 = vunpack.c.h.b16 %v82
    %v366 = vunpack.c.l.b16 %v83
    %v367 = vunpack.c.h.b16 %v83
    %v368 = vunpack.c.l.b16 %v84
    %v369 = vunpack.c.h.b16 %v84
    %v370 = vunpack.c.l.b16 %v85
    %v371 = vunpack.c.h.b16 %v85
    %v372 = vunpack.c.l.b16 %v86
    %v373 = vunpack.c.h.b16 %v86
    %v374 = vunpack.c.l.b16 %v87
    %v375 = vunpack.c.h.b16 %v87
    %v376 = vunpack.c.l.b16 %v88
    %v377 = vunpack.c.h.b16 %v88
    %v378 = vunpack.c.l.b16 %v89
    %v379 = vunpack.c.h.b16 %v89
    %v380 = vunpack.c.l.b16 %v90
    %v381 = vunpack.c.h.b16 %v90
    %v382 = vunpack.c.l.b16 %v91
    %v383 = vunpack.c.h.b16 %v91
    %v384 = vunpack.c.l.b16 %v92
    %v385 = vunpack.c.h.b16 %v92
    %v386 = vunpack.c.l.b16 %v93
    %v387 = vunpack.c.h.b16 %v93
    %v388 = vunpack.c.l.b16 %v94
    %v389 = vunpack.c.h.b16 %v94
    %v390 = vunpack.c.l.b16 %v95
    %v391 = vunpack.c.h.b16 %v95
    %v392 = vunpack.c.l.b16 %v96
    %v393 = vunpack.c.h.b16 %v96
    %v394 = vunpack.c.l.b16 %v97
    %v395 = vunpack.c.h.b16 %v97
    %v396 = vunpack.c.l.b16 %v98
    %v397 = vunpack.c.h.b16 %v98
    %v398 = vunpack.c.l.b16 %v99
    %v399 = vunpack.c.h.b16 %v99
    %v400 = vunpack.c.l.b16 %v100
    %v401 = vunpack.c.h.b16 %v100
    %v402 = vunpack.c.l.b16 %v101
    %v403 = vunpack.c.h.b16 %v101
    %v404 = vunpack.c.l.b16 %v102
    %v405 = vunpack.c.h.b16 %v102
    %v406 = vunpack.c.l.b16 %v103
    %v407 = vunpack.c.h.b16 %v103
    %v408 = vunpack.c.l.b16 %v104
    %v409 = vunpack.c.h.b16 %v104
    %v410 = vunpack.c.l.b16 %v105
    %v411 = vunpack.c.h.b16 %v105
    %v412 = vunpack.c.l.b16 %v106
    %v413 = vunpack.c.h.b16 %v106
    %v414 = vunpack.c.l.b16 %v107
    %v415 = vunpack.c.h.b16 %v107
    %v416 = vunpack.c.l.b16 %v108
    %v417 = vunpack.c.h.b16 %v108
    %v418 = vunpack.c.l.b16 %v109
    %v419 = vunpack.c.h.b16 %v109
    %v420 = vunpack.c.l.b16 %v110
    %v421 = vunpack.c.h.b16 %v110
    %v422 = vunpack.c.l.b16 %v111
    %v423 = vunpack.c.h.b16 %v111
    %v424 = vunpack.c.l.b16 %v112
    %v425 = vunpack.c.h.b16 %v112
    %v426 = vunpack.c.l.b16 %v113
    %v427 = vunpack.c.h.b16 %v113
    %v428 = vunpack.c.l.b16 %v114
    %v429 = vunpack.c.h.b16 %v114
    %v430 = vunpack.c.l.b16 %v115
    %v431 = vunpack.c.h.b16 %v115
    %v432 = vunpack.c.l.b16 %v116
    %v433 = vunpack.c.h.b16 %v116
    %v434 = vunpack.c.l.b16 %v117
    %v435 = vunpack.c.h.b16 %v117
    %v436 = vunpack.c.l.b16 %v118
    %v437 = vunpack.c.h.b16 %v118
    %v438 = vunpack.c.l.b16 %v119
    %v439 = vunpack.c.h.b16 %v119
    %v440 = vunpack.c.l.b16 %v120
    %v441 = vunpack.c.h.b16 %v120
    %v442 = vunpack.c.l.b16 %v121
    %v443 = vunpack.c.h.b16 %v121
    %v444 = vunpack.c.l.b16 %v122
    %v445 = vunpack.c.h.b16 %v122
    %v446 = vunpack.c.l.b16 %v123
    %v447 = vunpack.c.h.b16 %v123
    %v448 = vunpack.c.l.b16 %v124
    %v449 = vunpack.c.h.b16 %v124
    %v450 = vunpack.c.l.b16 %v125
    %v451 = vunpack.c.h.b16 %v125
    %v452 = vunpack.c.l.b16 %v126
    %v453 = vunpack.c.h.b16 %v126
    %v454 = vunpack.c.l.b16 %v127
    %v455 = vunpack.c.h.b16 %v127
    %v456 = vunpack.c.l.b16 %v128
    %v457 = vunpack.c.h.b16 %v128
    %v458 = vunpack.c.l.b16 %v129
    %v459 = vunpack.c.h.b16 %v129
    %v460 = vunpack.c.l.b16 %v130
    %v461 = vunpack.c.h.b16 %v130
    %v462 = vunpack.c.l.b16 %v131
    %v463 = vunpack.c.h.b16 %v131
    %v464 = vunpack.c.l.b16 %v132
    %v465 = vunpack.c.h.b16 %v132
    %v466 = vunpack.c.l.b16 %v133
    %v467 = vunpack.c.h.b16 %v133
    %v468 = vunpack.c.l.b16 %v134
    %v469 = vunpack.c.h.b16 %v134
    %v470 = vunpack.c.l.b16 %v135
    %v471 = vunpack.c.h.b16 %v135
    %v472 = vunpack.c.l.b16 %v136
    %v473 = vunpack.c.h.b16 %v136
    %v474 = vunpack.c.l.b16 %v137
    %v475 = vunpack.c.h.b16 %v137
    %v476 = vunpack.c.l.b16 %v138
    %v477 = vunpack.c.h.b16 %v138
    %v478 = vunpack.c.l.b16 %v139
    %v479 = vunpack.c.h.b16 %v139
    %v480 = vunpack.c.l.b16 %v140
    %v481 = vunpack.c.h.b16 %v140
    %v482 = vunpack.c.l.b16 %v141
    %v483 = vunpack.c.h.b16 %v141
    %v484 = vunpack.c.l.b16 %v142
    %v485 = vunpack.c.h.b16 %v142
    %v486 = vunpack.c.l.b16 %v143
    %v487 = vunpack.c.h.b16 %v143
    %v488 = vunpack.c.l.b16 %v144
    %v489 = vunpack.c.h.b16 %v144
    %v490 = vunpack.c.l.b16 %v145
    %v491 = vunpack.c.h.b16 %v145
    %v492 = vunpack.c.l.b16 %v146
    %v493 = vunpack.c.h.b16 %v146
    %v494 = vunpack.c.l.b16 %v147
    %v495 = vunpack.c.h.b16 %v147
    %v496 = vunpack.c.l.b16 %v148
    %v497 = vunpack.c.h.b16 %v148
    %v498 = vunpack.c.l.b16 %v149
    %v499 = vunpack.c.h.b16 %v149
    %v500 = vunpack.c.l.b16 %v150
    %v501 = vunpack.c.h.b16 %v150
    %v502 = vunpack.c.l.b16 %v151
    %v503 = vunpack.c.h.b16 %v151
    %v504 = vunpack.c.l.b16 %v152
    %v505 = vunpack.c.h.b16 %v152
    %v506 = vunpack.c.l.b16 %v153
    %v507 = vunpack.c.h.b16 %v153
    %v508 = vunpack.c.l.b16 %v154
    %v509 = vunpack.c.h.b16 %v154
    %v510 = vunpack.c.l.b16 %v155
    %v511 = vunpack.c.h.b16 %v155
    %v512 = vunpack.c.l.b16 %v156
    %v513 = vunpack.c.h.b16 %v156
    %v514 = vunpack.c.l.b16 %v157
    %v515 = vunpack.c.h.b16 %v157
    %v516 = vunpack.c.l.b16 %v158
    %v517 = vunpack.c.h.b16 %v158
    %v518 = vunpack.c.l.b16 %v159
    %v519 = vunpack.c.h.b16 %v159
    %v520 = vunpack.c.l.b16 %v160
    %v521 = vunpack.c.h.b16 %v160
    %v522 = vunpack.c.l.b16 %v161
    %v523 = vunpack.c.h.b16 %v161
    %v524 = vunpack.c.l.b16 %v162
    %v525 = vunpack.c.h.b16 %v162
    %v526 = vunpack.c.l.b16 %v163
    %v527 = vunpack.c.h.b16 %v163
    %v528 = vunpack.c.l.b16 %v164
    %v529 = vunpack.c.h.b16 %v164
    %v530 = vunpack.c.l.b16 %v165
    %v531 = vunpack.c.h.b16 %v165
    %v532 = vunpack.c.l.b16 %v166
    %v533 = vunpack.c.h.b16 %v166
    %v534 = vunpack.c.l.b16 %v167
    %v535 = vunpack.c.h.b16 %v167
    %v536 = vunpack.c.l.b16 %v168
    %v537 = vunpack.c.h.b16 %v168
    %v538 = vunpack.c.l.b16 %v169
    %v539 = vunpack.c.h.b16 %v169
    %v540 = vunpack.c.l.b16 %v170
    %v541 = vunpack.c.h.b16 %v170
    %v542 = vunpack.c.l.b16 %v171
    %v543 = vunpack.c.h.b16 %v171
    %v544 = vunpack.c.l.b16 %v172
    %v545 = vunpack.c.h.b16 %v172
    %v546 = vunpack.c.l.b16 %v173
    %v547 = vunpack.c.h.b16 %v173
    %v548 = vunpack.c.l.b16 %v174
    %v549 = vunpack.c.h.b16 %v174
    %v550 = vunpack.c.l.b16 %v175
    %v551 = vunpack.c.h.b16 %v175
    %v552 = vpack.c.b16 %v358, %v356
    %v553 = vpack.c.b16 %v359, %v357
    %v554 = vpack.c.b16 %v362, %v360
    %v555 = vpack.c.b16 %v363, %v361
    %v556 = vpack.c.b16 %v366, %v364
    %v557 = vpack.c.b16 %v367, %v365
    %v558 = vpack.c.b16 %v370, %v368
    %v559 = vpack.c.b16 %v371, %v369
    %v560 = vpack.c.b16 %v374, %v372
    %v561 = vpack.c.b16 %v375, %v373
    %v562 = vpack.c.b16 %v378, %v376
    %v563 = vpack.c.b16 %v379, %v377
    %v564 = vpack.c.b16 %v382, %v380
    %v565 = vpack.c.b16 %v383, %v381
    %v566 = vpack.c.b16 %v386, %v384
    %v567 = vpack.c.b16 %v387, %v385
    %v568 = vpack.c.b16 %v390, %v388
    %v569 = vpack.c.b16 %v391, %v389
    %v570 = vpack.c.b16 %v394, %v392
    %v571 = vpack.c.b16 %v395, %v393
    %v572 = vpack.c.b16 %v398, %v396
    %v573 = vpack.c.b16 %v399, %v397
    %v574 = vpack.c.b16 %v402, %v400
    %v575 = vpack.c.b16 %v403, %v401
    %v576 = vpack.c.b16 %v406, %v404
    %v577 = vpack.c.b16 %v407, %v405
    %v578 = vpack.c.b16 %v410, %v408
    %v579 = vpack.c.b16 %v411, %v409
    %v580 = vpack.c.b16 %v414, %v412
    %v581 = vpack.c.b16 %v415, %v413
    %v582 = vpack.c.b16 %v418, %v416
    %v583 = vpack.c.b16 %v419, %v417
    %v584 = vpack.c.b16 %v422, %v420
    %v585 = vpack.c.b16 %v423, %v421
    %v586 = vpack.c.b16 %v426, %v424
    %v587 = vpack.c.b16 %v427, %v425
    %v588 = vpack.c.b16 %v430, %v428
    %v589 = vpack.c.b16 %v431, %v429
    %v590 = vpack.c.b16 %v434, %v432
    %v591 = vpack.c.b16 %v435, %v433
    %v592 = vpack.c.b16 %v438, %v436
    %v593 = vpack.c.b16 %v439, %v437
    %v594 = vpack.c.b16 %v442, %v440
    %v595 = vpack.c.b16 %v443, %v441
    %v596 = vpack.c.b16 %v446, %v444
    %v597 = vpack.c.b16 %v447, %v445
    %v598 = vpack.c.b16 %v450, %v448
    %v599 = vpack.c.b16 %v451, %v449
    %v600 = vpack.c.b16 %v454, %v452
    %v601 = vpack.c.b16 %v455, %v453
    %v602 = vpack.c.b16 %v458, %v456
    %v603 = vpack.c.b16 %v459, %v457
    %v604 = vpack.c.b16 %v462, %v460
    %v605 = vpack.c.b16 %v463, %v461
    %v606 = vpack.c.b16 %v466, %v464
    %v607 = vpack.c.b16 %v467, %v465
    %v608 = vpack.c.b16 %v470, %v468
    %v609 = vpack.c.b16 %v471, %v469
    %v610 = vpack.c.b16 %v474, %v472
    %v611 = vpack.c.b16 %v475, %v473
    %v612 = vpack.c.b16 %v478, %v476
    %v613 = vpack.c.b16 %v479, %v477
    %v614 = vpack.c.b16 %v482, %v480
    %v615 = vpack.c.b16 %v483, %v481
    %v616 = vpack.c.b16 %v486, %v484
    %v617 = vpack.c.b16 %v487, %v485
    %v618 = vpack.c.b16 %v490, %v488
    %v619 = vpack.c.b16 %v491, %v489
    %v620 = vpack.c.b16 %v494, %v492
    %v621 = vpack.c.b16 %v495, %v493
    %v622 = vpack.c.b16 %v498, %v496
    %v623 = vpack.c.b16 %v499, %v497
    %v624 = vpack.c.b16 %v502, %v500
    %v625 = vpack.c.b16 %v503, %v501
    %v626 = vpack.c.b16 %v506, %v504
    %v627 = vpack.c.b16 %v507, %v505
    %v628 = vpack.c.b16 %v510, %v508
    %v629 = vpack.c.b16 %v511, %v509
    %v630 = vpack.c.b16 %v514, %v512
    %v631 = vpack.c.b16 %v515, %v513
    %v632 = vpack.c.b16 %v518, %v516
    %v633 = vpack.c.b16 %v519, %v517
    %v634 = vpack.c.b16 %v522, %v520
    %v635 = vpack.c.b16 %v523, %v521
    %v636 = vpack.c.b16 %v526, %v524
    %v637 = vpack.c.b16 %v527, %v525
    %v638 = vpack.c.b16 %v530, %v528
    %v639 = vpack.c.b16 %v531, %v529
    %v640 = vpack.c.b16 %v534, %v532
    %v641 = vpack.c.b16 %v535, %v533
    %v642 = vpack.c.b16 %v538, %v536
    %v643 = vpack.c.b16 %v539, %v537
    %v644 = vpack.c.b16 %v542, %v540
    %v645 = vpack.c.b16 %v543, %v541
    %v646 = vpack.c.b16 %v546, %v544
    %v647 = vpack.c.b16 %v547, %v545
    %v648 = vpack.c.b16 %v550, %v548
    %v649 = vpack.c.b16 %v551, %v549
    %vm748 = vcmask 130048
    %v750 = vsel %vm748, %v238, 0
    %v753 = vsel %vm748, %v245, 0
    %755 = vmatprep.subr.bf16.mxu0 %v553
    %756 = vmatpush1.bf16.msra.mxu0 %v552
    %757 = vmatprep.subr.bf16.mxu0 %v555
    %758 = vmatpush1.bf16.msra.mxu0 %v554
    %759 = vmatprep.subr.bf16.mxu0 %v557
    %760 = vmatpush1.bf16.msra.mxu0 %v556
    %761 = vmatprep.subr.bf16.mxu0 %v559
    %762 = vmatpush1.bf16.msra.mxu0 %v558
    %763 = vmatprep.subr.bf16.mxu0 %v561
    %764 = vmatpush1.bf16.msra.mxu0 %v560
    %765 = vmatprep.subr.bf16.mxu0 %v563
    %766 = vmatpush1.bf16.msra.mxu0 %v562
    %767 = vmatprep.subr.bf16.mxu0 %v565
    %768 = vmatpush1.bf16.msra.mxu0 %v564
    %769 = vmatprep.subr.bf16.mxu0 %v567
    %770 = vmatpush1.bf16.msra.mxu0 %v566
    %771 = vmatprep.subr.bf16.mxu0 %v569
    %772 = vmatpush1.bf16.msra.mxu0 %v568
    %773 = vmatprep.subr.bf16.mxu0 %v571
    %774 = vmatpush1.bf16.msra.mxu0 %v570
    %775 = vmatprep.subr.bf16.mxu0 %v573
    %776 = vmatpush1.bf16.msra.mxu0 %v572
    %777 = vmatprep.subr.bf16.mxu0 %v575
    %778 = vmatpush1.bf16.msra.mxu0 %v574
    %779 = vmatprep.subr.bf16.mxu0 %v577
    %780 = vmatpush1.bf16.msra.mxu0 %v576
    %781 = vmatprep.subr.bf16.mxu0 %v579
    %782 = vmatpush1.bf16.msra.mxu0 %v578
    %783 = vmatprep.subr.bf16.mxu0 %v581
    %784 = vmatpush1.bf16.msra.mxu0 %v580
    %785 = vmatprep.subr.bf16.mxu0 %v583
    %786 = vmatpush1.bf16.msra.mxu0 %v582
    %787 = vmatprep.mubr.bf16.mxu0 %v233
    %788 = vmatmul.mubr.bf16.gmra.mrb[0].mxu0 %v232
    %v789 = vpop.f32.mrb[0].mxu0
    %v790 = vadd.f32 %v181, %v789
    %v791 = vpop.f32.mrb[0].mxu0
    %v792 = vadd.f32 %v185, %v791
    %v793 = vpop.f32.mrb[0].mxu0
    %v794 = vadd.f32 %v181, %v793
    %v795 = vpop.f32.mrb[0].mxu0
    %v796 = vadd.f32 %v185, %v795
    %797 = vmatprep.mubr.bf16.mxu0 %v240
    %798 = vmatmul.mubr.bf16.gmra.mrb[0].mxu0 %v239
    %v799 = vpop.f32.mrb[0].mxu0
    %v800 = vadd.f32 %v181, %v799
    %v801 = vpop.f32.mrb[0].mxu0
    %v802 = vadd.f32 %v185, %v801
    %v803 = vpop.f32.mrb[0].mxu0
    %v804 = vadd.f32 %v181, %v803
    %v805 = vpop.f32.mrb[0].mxu0
    %v806 = vadd.f32 %v185, %v805
    %807 = vdwg.mxu0
    %808 = vmatprep.subr.bf16.mxu0 %v585
    %809 = vmatpush1.bf16.msra.mxu0 %v584
    %810 = vmatprep.subr.bf16.mxu0 %v587
    %811 = vmatpush1.bf16.msra.mxu0 %v586
    %812 = vmatprep.subr.bf16.mxu0 %v589
    %813 = vmatpush1.bf16.msra.mxu0 %v588
    %814 = vmatprep.subr.bf16.mxu0 %v591
    %815 = vmatpush1.bf16.msra.mxu0 %v590
    %816 = vmatprep.subr.bf16.mxu0 %v593
    %817 = vmatpush1.bf16.msra.mxu0 %v592
    %818 = vmatprep.subr.bf16.mxu0 %v595
    %819 = vmatpush1.bf16.msra.mxu0 %v594
    %820 = vmatprep.subr.bf16.mxu0 %v597
    %821 = vmatpush1.bf16.msra.mxu0 %v596
    %822 = vmatprep.subr.bf16.mxu0 %v599
    %823 = vmatpush1.bf16.msra.mxu0 %v598
    %824 = vmatprep.subr.bf16.mxu0 %v601
    %825 = vmatpush1.bf16.msra.mxu0 %v600
    %826 = vmatprep.subr.bf16.mxu0 %v603
    %827 = vmatpush1.bf16.msra.mxu0 %v602
    %828 = vmatprep.subr.bf16.mxu0 %v605
    %829 = vmatpush1.bf16.msra.mxu0 %v604
    %830 = vmatprep.subr.bf16.mxu0 %v607
    %831 = vmatpush1.bf16.msra.mxu0 %v606
    %832 = vmatprep.subr.bf16.mxu0 %v609
    %833 = vmatpush1.bf16.msra.mxu0 %v608
    %834 = vmatprep.subr.bf16.mxu0 %v611
    %835 = vmatpush1.bf16.msra.mxu0 %v610
    %836 = vmatprep.subr.bf16.mxu0 %v613
    %837 = vmatpush1.bf16.msra.mxu0 %v612
    %838 = vmatprep.subr.bf16.mxu0 %v615
    %839 = vmatpush1.bf16.msra.mxu0 %v614
    %840 = vmatprep.mubr.bf16.mxu0 %v235
    %841 = vmatmul.mubr.bf16.gmra.mrb[0].mxu0 %v234
    %v842 = vpop.f32.mrb[0].mxu0
    %v843 = vadd.f32 %v790, %v842
    %v844 = vpop.f32.mrb[0].mxu0
    %v845 = vadd.f32 %v792, %v844
    %v846 = vpop.f32.mrb[0].mxu0
    %v847 = vadd.f32 %v794, %v846
    %v848 = vpop.f32.mrb[0].mxu0
    %v849 = vadd.f32 %v796, %v848
    %850 = vmatprep.mubr.bf16.mxu0 %v242
    %851 = vmatmul.mubr.bf16.gmra.mrb[0].mxu0 %v241
    %v852 = vpop.f32.mrb[0].mxu0
    %v853 = vadd.f32 %v800, %v852
    %v854 = vpop.f32.mrb[0].mxu0
    %v855 = vadd.f32 %v802, %v854
    %v856 = vpop.f32.mrb[0].mxu0
    %v857 = vadd.f32 %v804, %v856
    %v858 = vpop.f32.mrb[0].mxu0
    %v859 = vadd.f32 %v806, %v858
    %860 = vdwg.mxu0
    %861 = vmatprep.subr.bf16.mxu0 %v617
    %862 = vmatpush1.bf16.msra.mxu0 %v616
    %863 = vmatprep.subr.bf16.mxu0 %v619
    %864 = vmatpush1.bf16.msra.mxu0 %v618
    %865 = vmatprep.subr.bf16.mxu0 %v621
    %866 = vmatpush1.bf16.msra.mxu0 %v620
    %867 = vmatprep.subr.bf16.mxu0 %v623
    %868 = vmatpush1.bf16.msra.mxu0 %v622
    %869 = vmatprep.subr.bf16.mxu0 %v625
    %870 = vmatpush1.bf16.msra.mxu0 %v624
    %871 = vmatprep.subr.bf16.mxu0 %v627
    %872 = vmatpush1.bf16.msra.mxu0 %v626
    %873 = vmatprep.subr.bf16.mxu0 %v629
    %874 = vmatpush1.bf16.msra.mxu0 %v628
    %875 = vmatprep.subr.bf16.mxu0 %v631
    %876 = vmatpush1.bf16.msra.mxu0 %v630
    %877 = vmatprep.subr.bf16.mxu0 %v633
    %878 = vmatpush1.bf16.msra.mxu0 %v632
    %879 = vmatprep.subr.bf16.mxu0 %v635
    %880 = vmatpush1.bf16.msra.mxu0 %v634
    %881 = vmatprep.subr.bf16.mxu0 %v637
    %882 = vmatpush1.bf16.msra.mxu0 %v636
    %883 = vmatprep.subr.bf16.mxu0 %v639
    %884 = vmatpush1.bf16.msra.mxu0 %v638
    %885 = vmatprep.subr.bf16.mxu0 %v641
    %886 = vmatpush1.bf16.msra.mxu0 %v640
    %887 = vmatprep.subr.bf16.mxu0 %v643
    %888 = vmatpush1.bf16.msra.mxu0 %v642
    %889 = vmatprep.subr.bf16.mxu0 %v645
    %890 = vmatpush1.bf16.msra.mxu0 %v644
    %891 = vmatprep.subr.bf16.mxu0 %v647
    %892 = vmatpush1.bf16.msra.mxu0 %v646
    %893 = vmatprep.mubr.bf16.mxu0 %v237
    %894 = vmatmul.mubr.bf16.gmra.mrb[0].mxu0 %v236
    %v895 = vpop.f32.mrb[0].mxu0
    %v896 = vadd.f32 %v843, %v895
    %v897 = vpop.f32.mrb[0].mxu0
    %v898 = vadd.f32 %v845, %v897
    %v899 = vpop.f32.mrb[0].mxu0
    %v900 = vadd.f32 %v847, %v899
    %v901 = vpop.f32.mrb[0].mxu0
    %v902 = vadd.f32 %v849, %v901
    %903 = vmatprep.mubr.bf16.mxu0 %v244
    %904 = vmatmul.mubr.bf16.gmra.mrb[0].mxu0 %v243
    %v905 = vpop.f32.mrb[0].mxu0
    %v906 = vadd.f32 %v853, %v905
    %v907 = vpop.f32.mrb[0].mxu0
    %v908 = vadd.f32 %v855, %v907
    %v909 = vpop.f32.mrb[0].mxu0
    %v910 = vadd.f32 %v857, %v909
    %v911 = vpop.f32.mrb[0].mxu0
    %v912 = vadd.f32 %v859, %v911
    %913 = vdwg.mxu0
    %914 = vmatprep.subr.bf16.mxu0 %v649
    %915 = vmatpush1.bf16.msra.mxu0 %v648
    %916 = vmatprep.subr.bf16.mxu0 0
    %917 = vmatpush1.bf16.msra.mxu0 0
    %918 = vmatprep.subr.bf16.mxu0 0
    %919 = vmatpush1.bf16.msra.mxu0 0
    %920 = vmatprep.subr.bf16.mxu0 0
    %921 = vmatpush1.bf16.msra.mxu0 0
    %922 = vmatprep.subr.bf16.mxu0 0
    %923 = vmatpush1.bf16.msra.mxu0 0
    %924 = vmatprep.subr.bf16.mxu0 0
    %925 = vmatpush1.bf16.msra.mxu0 0
    %926 = vmatprep.subr.bf16.mxu0 0
    %927 = vmatpush1.bf16.msra.mxu0 0
    %928 = vmatprep.subr.bf16.mxu0 0
    %929 = vmatpush1.bf16.msra.mxu0 0
    %930 = vmatprep.subr.bf16.mxu0 0
    %931 = vmatpush1.bf16.msra.mxu0 0
    %932 = vmatprep.subr.bf16.mxu0 0
    %933 = vmatpush1.bf16.msra.mxu0 0
    %934 = vmatprep.subr.bf16.mxu0 0
    %935 = vmatpush1.bf16.msra.mxu0 0
    %936 = vmatprep.subr.bf16.mxu0 0
    %937 = vmatpush1.bf16.msra.mxu0 0
    %938 = vmatprep.subr.bf16.mxu0 0
    %939 = vmatpush1.bf16.msra.mxu0 0
    %940 = vmatprep.subr.bf16.mxu0 0
    %941 = vmatpush1.bf16.msra.mxu0 0
    %942 = vmatprep.subr.bf16.mxu0 0
    %943 = vmatpush1.bf16.msra.mxu0 0
    %944 = vmatprep.subr.bf16.mxu0 0
    %945 = vmatpush1.bf16.msra.mxu0 0
    %946 = vmatprep.mubr.bf16.mxu0 0
    %947 = vmatmul.mubr.bf16.gmra.mrb[0].mxu0 %v750
    %v948 = vpop.f32.mrb[0].mxu0
    %v949 = vadd.f32 %v896, %v948
    %v950 = vpop.f32.mrb[0].mxu0
    %v951 = vadd.f32 %v898, %v950
    %v952 = vpop.f32.mrb[0].mxu0
    %v953 = vadd.f32 %v900, %v952
    %v954 = vpop.f32.mrb[0].mxu0
    %v955 = vadd.f32 %v902, %v954
    %956 = vmatprep.mubr.bf16.mxu0 0
    %957 = vmatmul.mubr.bf16.gmra.mrb[0].mxu0 %v753
    %v958 = vpop.f32.mrb[0].mxu0
    %v959 = vadd.f32 %v906, %v958
    %v960 = vpop.f32.mrb[0].mxu0
    %v961 = vadd.f32 %v908, %v960
    %v962 = vpop.f32.mrb[0].mxu0
    %v963 = vadd.f32 %v910, %v962
    %v964 = vpop.f32.mrb[0].mxu0
    %v965 = vadd.f32 %v912, %v964
    %966 = vdwg.mxu0
    %v967 = vmax.f32 %v949, 0.0
    %v968 = vmax.f32 %v951, 0.0
    %v969 = vmax.f32 %v953, 0.0
    %v970 = vmax.f32 %v955, 0.0
    %v971 = vmax.f32 %v959, 0.0
    %v972 = vmax.f32 %v961, 0.0
    %v973 = vmax.f32 %v963, 0.0
    %v974 = vmax.f32 %v965, 0.0
    %v975 = vpack.c.bf16 %v969, %v967
    %v976 = vpack.c.bf16 %v970, %v968
    %v977 = vpack.c.bf16 %v973, %v971
    %v978 = vpack.c.bf16 %v974, %v972
    %v979 = vld [vmem:[#allocation6] sm:$0xf]
    %v980 = vld [vmem:[#allocation6 + $0x4] sm:$0xf]
    %v981 = vld [vmem:[#allocation6 + $0x8] sm:$0xf]
    %v982 = vld [vmem:[#allocation6 + $0xc] sm:$0xf]
    %v983 = vld [vmem:[#allocation6 + $0x10] sm:$0xf]
    %v984 = vld [vmem:[#allocation6 + $0x14] sm:$0xf]
    %v985 = vld [vmem:[#allocation6 + $0x18] sm:$0xf]
    %v986 = vld [vmem:[#allocation6 + $0x1c] sm:$0xf]
    %v987 = vld [vmem:[#allocation6 + $0x20] sm:$0xf]
    %v988 = vld [vmem:[#allocation6 + $0x24] sm:$0xf]
    %v989 = vld [vmem:[#allocation6 + $0x28] sm:$0xf]
    %v990 = vld [vmem:[#allocation6 + $0x2c] sm:$0xf]
    %v991 = vld [vmem:[#allocation6 + $0x30] sm:$0xf]
    %v992 = vld [vmem:[#allocation6 + $0x34] sm:$0xf]
    %v993 = vld [vmem:[#allocation6 + $0x38] sm:$0xf]
    %v994 = vld [vmem:[#allocation6 + $0x3c] sm:$0xf]
    %v995 = vld [vmem:[#allocation6 + $0x40] sm:$0xf]
    %v996 = vld [vmem:[#allocation6 + $0x44] sm:$0xf]
    %v997 = vld [vmem:[#allocation6 + $0x48] sm:$0xf]
    %v998 = vld [vmem:[#allocation6 + $0x4c] sm:$0xf]
    %v999 = vld [vmem:[#allocation6 + $0x50] sm:$0xf]
    %v1000 = vld [vmem:[#allocation6 + $0x54] sm:$0xf]
    %v1001 = vld [vmem:[#allocation6 + $0x58] sm:$0xf]
    %v1002 = vld [vmem:[#allocation6 + $0x5c] sm:$0xf]
    %v1003 = vld [vmem:[#allocation6 + $0x60] sm:$0xf]
    %v1004 = vld [vmem:[#allocation6 + $0x64] sm:$0xf]
    %v1005 = vld [vmem:[#allocation6 + $0x68] sm:$0xf]
    %v1006 = vld [vmem:[#allocation6 + $0x6c] sm:$0xf]
    %v1007 = vld [vmem:[#allocation6 + $0x70] sm:$0xf]
    %v1008 = vld [vmem:[#allocation6 + $0x74] sm:$0xf]
    %v1009 = vld [vmem:[#allocation6 + $0x78] sm:$0xf]
    %v1010 = vld [vmem:[#allocation6 + $0x7c] sm:$0xf]
    %v1011 = vld [vmem:[%s4] sm:$0x1]
    %v1013 = vlaneseq
    %v1014 = vshrl.u32 %v1013, 7
    %v1015 = vsub.s32 0, %v1014
    %v1016 = vrot.slane %v1011, %v1015
    %v1050 = vunpack.c.l.b16 %v979
    %v1051 = vunpack.c.l.b16 %v980
    %v1052 = vunpack.c.l.b16 %v981
    %v1053 = vunpack.c.l.b16 %v982
    %v1054 = vunpack.c.l.b16 %v983
    %v1055 = vunpack.c.l.b16 %v984
    %v1056 = vunpack.c.l.b16 %v985
    %v1057 = vunpack.c.l.b16 %v986
    %v1058 = vunpack.c.l.b16 %v987
    %v1059 = vunpack.c.l.b16 %v988
    %v1060 = vunpack.c.l.b16 %v989
    %v1061 = vunpack.c.l.b16 %v990
    %v1062 = vunpack.c.l.b16 %v991
    %v1063 = vunpack.c.l.b16 %v992
    %v1064 = vunpack.c.l.b16 %v993
    %v1065 = vunpack.c.l.b16 %v994
    %v1066 = vunpack.c.l.b16 %v995
    %v1067 = vunpack.c.l.b16 %v996
    %v1068 = vunpack.c.l.b16 %v997
    %v1069 = vunpack.c.l.b16 %v998
    %v1070 = vunpack.c.l.b16 %v999
    %v1071 = vunpack.c.l.b16 %v1000
    %v1072 = vunpack.c.l.b16 %v1001
    %v1073 = vunpack.c.l.b16 %v1002
    %v1074 = vunpack.c.l.b16 %v1003
    %v1075 = vunpack.c.l.b16 %v1004
    %v1076 = vunpack.c.l.b16 %v1005
    %v1077 = vunpack.c.l.b16 %v1006
    %v1078 = vunpack.c.l.b16 %v1007
    %v1079 = vunpack.c.l.b16 %v1008
    %v1080 = vunpack.c.l.b16 %v1009
    %v1081 = vunpack.c.l.b16 %v1010
    %v1082 = vpack.c.b16 %v1051, %v1050
    %v1083 = vpack.c.b16 %v1053, %v1052
    %v1084 = vpack.c.b16 %v1055, %v1054
    %v1085 = vpack.c.b16 %v1057, %v1056
    %v1086 = vpack.c.b16 %v1059, %v1058
    %v1087 = vpack.c.b16 %v1061, %v1060
    %v1088 = vpack.c.b16 %v1063, %v1062
    %v1089 = vpack.c.b16 %v1065, %v1064
    %v1090 = vpack.c.b16 %v1067, %v1066
    %v1091 = vpack.c.b16 %v1069, %v1068
    %v1092 = vpack.c.b16 %v1071, %v1070
    %v1093 = vpack.c.b16 %v1073, %v1072
    %v1094 = vpack.c.b16 %v1075, %v1074
    %v1095 = vpack.c.b16 %v1077, %v1076
    %v1096 = vpack.c.b16 %v1079, %v1078
    %v1097 = vpack.c.b16 %v1081, %v1080
    %1114 = vmatprep.subr.bf16.mxu0 0
    %1115 = vmatpush1.bf16.msra.mxu0 %v1082
    %1116 = vmatprep.subr.bf16.mxu0 0
    %1117 = vmatpush1.bf16.msra.mxu0 %v1083
    %1118 = vmatprep.subr.bf16.mxu0 0
    %1119 = vmatpush1.bf16.msra.mxu0 %v1084
    %1120 = vmatprep.subr.bf16.mxu0 0
    %1121 = vmatpush1.bf16.msra.mxu0 %v1085
    %1122 = vmatprep.subr.bf16.mxu0 0
    %1123 = vmatpush1.bf16.msra.mxu0 %v1086
    %1124 = vmatprep.subr.bf16.mxu0 0
    %1125 = vmatpush1.bf16.msra.mxu0 %v1087
    %1126 = vmatprep.subr.bf16.mxu0 0
    %1127 = vmatpush1.bf16.msra.mxu0 %v1088
    %1128 = vmatprep.subr.bf16.mxu0 0
    %1129 = vmatpush1.bf16.msra.mxu0 %v1089
    %1130 = vmatprep.subr.bf16.mxu0 0
    %1131 = vmatpush1.bf16.msra.mxu0 %v1090
    %1132 = vmatprep.subr.bf16.mxu0 0
    %1133 = vmatpush1.bf16.msra.mxu0 %v1091
    %1134 = vmatprep.subr.bf16.mxu0 0
    %1135 = vmatpush1.bf16.msra.mxu0 %v1092
    %1136 = vmatprep.subr.bf16.mxu0 0
    %1137 = vmatpush1.bf16.msra.mxu0 %v1093
    %1138 = vmatprep.subr.bf16.mxu0 0
    %1139 = vmatpush1.bf16.msra.mxu0 %v1094
    %1140 = vmatprep.subr.bf16.mxu0 0
    %1141 = vmatpush1.bf16.msra.mxu0 %v1095
    %1142 = vmatprep.subr.bf16.mxu0 0
    %1143 = vmatpush1.bf16.msra.mxu0 %v1096
    %1144 = vmatprep.subr.bf16.mxu0 0
    %1145 = vmatpush1.bf16.msra.mxu0 %v1097
    %1146 = vmatprep.mubr.bf16.mxu0 %v976
    %1147 = vmatmul.mubr.bf16.gmra.mrb[0].mxu0 %v975
    %v1148 = vpop.f32.mrb[0].mxu0
    %v1149 = vadd.f32 %v1016, %v1148
    %v1150 = vpop.f32.mrb[0].mxu0
    %v1151 = vpop.f32.mrb[0].mxu0
    %v1152 = vadd.f32 %v1016, %v1151
    %v1153 = vpop.f32.mrb[0].mxu0
    %1154 = vmatprep.mubr.bf16.mxu0 %v978
    %1155 = vmatmul.mubr.bf16.gmra.mrb[0].mxu0 %v977
    %v1156 = vpop.f32.mrb[0].mxu0
    %v1157 = vadd.f32 %v1016, %v1156
    %v1158 = vpop.f32.mrb[0].mxu0
    %v1159 = vpop.f32.mrb[0].mxu0
    %v1160 = vadd.f32 %v1016, %v1159
    %v1161 = vpop.f32.mrb[0].mxu0
    %1162 = vdwg.mxu0
    %1163 = vst [vmem:[%s5] sm:$0xff] %v1149
    %1164 = vst [vmem:[%s5 + $0x8] sm:$0xff] %v1152
    %1165 = vst [vmem:[%s5 + $0x10] sm:$0xff] %v1157
    %1166 = vst [vmem:[%s5 + $0x18] sm:$0xff] %v1160
    // Predicated region
    $region34: #{mlp_forward.1} parent=1 // pred_check
      _
    $region35: #{mlp_forward.1} parent=1 // pred_check_branch
      %1168 = sbr.rel (0) target = $region37
    $region36: #{mlp_forward.1} parent=1 // pred_region
      _
    $region37: #{mlp_forward.1} parent=1 // pred_fallthru
      _
    // Predicated region
    $region38: #{mlp_forward.1} parent=1 // pred_check
      _
    $region39: #{mlp_forward.1} parent=1 // pred_check_branch
      %1170 = sbr.rel (0) target = $region41
    $region40: #{mlp_forward.1} parent=1 // pred_region
      _
    $region41: #{mlp_forward.1} parent=1 // pred_fallthru
      _
    %1171 = vsyncpa [#allocation3], 1
    %1172 = vsyncpa [#allocation5], 1

</llo_original>
